<compile_context>
chip_gen: v7x
topology: tpu7x:2x2x1
jax: 0.10.0
libtpu: 0.0.40
codegen_flags: <defaults>
</compile_context>

<pallas_src>
from functools import partial

import jax
import jax.numpy as jnp
from jax.experimental import pallas as pl
from jax.experimental.pallas import tpu as pltpu

D_IN, D_H1, D_H2, D_OUT = 10, 50, 100, 100


def _simplenet_kernel(x_ref, w1_ref, b1_ref, w2_ref, b2_ref, w3_ref, b3_ref, o_ref):
    # Layer 1: [TB,10] @ [10,50] + [1,50] -> relu
    h1 = jnp.dot(x_ref[...], w1_ref[...], preferred_element_type=jnp.float32)
    h1 = jnp.maximum(h1 + b1_ref[...], 0.0)
    # Layer 2: [TB,50] @ [50,100] + [1,100] -> relu
    h2 = jnp.dot(h1, w2_ref[...], preferred_element_type=jnp.float32)
    h2 = jnp.maximum(h2 + b2_ref[...], 0.0)
    # Layer 3: [TB,100] @ [100,100] + [1,100] -> sigmoid
    h3 = jnp.dot(h2, w3_ref[...], preferred_element_type=jnp.float32) + b3_ref[...]
    # sigmoid(x) = 1 / (1 + exp(-x)): exp and approx reciprocal both run on the EUP.
    o_ref[...] = pl.reciprocal(1.0 + jnp.exp(-h3), approx=True).astype(o_ref.dtype)


def _round_up(n, m):
    return ((n + m - 1) // m) * m


@partial(jax.jit, static_argnames=("batch_tile",))
def simplenet_forward(x, params, *, batch_tile=1024):
    """x: [B, 10] float32. params: dict of w1,b1,w2,b2,w3,b3 (stored transposed)."""
    B = x.shape[0]

    # Batch tile: multiple of 8 (sublane constraint), capped at `batch_tile`.
    tb = min(batch_tile, _round_up(B, 8))
    b_pad = _round_up(B, tb)
    if b_pad != B:
        x = jnp.pad(x, ((0, b_pad - B), (0, 0)))
    grid = (b_pad // tb,)

    w1, b1, w2, b2, w3, b3 = (params["w1"], params["b1"], params["w2"],
                              params["b2"], params["w3"], params["b3"])

    # Weights/biases: full-array blocks, constant index_map -> VMEM-resident.
    def const(shape):
        return pl.BlockSpec(shape, lambda i: (0, 0))

    flops = 2 * b_pad * (D_IN * D_H1 + D_H1 * D_H2 + D_H2 * D_OUT)
    bytes_accessed = 4 * (
        b_pad * (D_IN + D_OUT)                                    # x in, out written
        + D_IN * D_H1 + D_H1 + D_H1 * D_H2 + D_H2                 # weights/biases
        + D_H2 * D_OUT + D_OUT
    )
    cost = pl.CostEstimate(flops=flops,
                           transcendentals=b_pad * D_OUT,
                           bytes_accessed=bytes_accessed)

    out = pl.pallas_call(
        _simplenet_kernel,
        out_shape=jax.ShapeDtypeStruct((b_pad, D_OUT), jnp.float32),
        grid=grid,
        in_specs=[
            pl.BlockSpec((tb, D_IN), lambda i: (i, 0)),   # x: batch-tiled, pipelined
            const((D_IN, D_H1)), const((1, D_H1)),        # w1, b1
            const((D_H1, D_H2)), const((1, D_H2)),        # w2, b2
            const((D_H2, D_OUT)), const((1, D_OUT)),      # w3, b3
        ],
        out_specs=pl.BlockSpec((tb, D_OUT), lambda i: (i, 0)),
        compiler_params=pltpu.CompilerParams(
            dimension_semantics=("parallel",),            # megacore sharding on v7x
            vmem_limit_bytes=32 * 1024 * 1024,            # safe on v5e/v6e/v7x
        ),
        cost_estimate=cost,
    )(x, w1, b1, w2, b2, w3, b3)

    return out[:B] if b_pad != B else out


def init_params(key):
    """Deterministic init matching PyTorch nn.Linear shapes (stored transposed)."""
    ks = jax.random.split(key, 6)

    def linear(kw, kb, fan_in, fan_out):
        bound = 1.0 / jnp.sqrt(fan_in)
        w = jax.random.uniform(kw, (fan_in, fan_out), jnp.float32, -bound, bound)
        b = jax.random.uniform(kb, (1, fan_out), jnp.float32, -bound, bound)
        return w, b

    w1, b1 = linear(ks[0], ks[1], D_IN, D_H1)
    w2, b2 = linear(ks[2], ks[3], D_H1, D_H2)
    w3, b3 = linear(ks[4], ks[5], D_H2, D_OUT)
    return dict(w1=w1, b1=b1, w2=w2, b2=b2, w3=w3, b3=b3)


def _reference_forward(x, p):
    h = jnp.maximum(x @ p["w1"] + p["b1"], 0.0)
    h = jnp.maximum(h @ p["w2"] + p["b2"], 0.0)
    return jax.nn.sigmoid(h @ p["w3"] + p["b3"])


if __name__ == "__main__":
    key = jax.random.PRNGKey(0)
    k_params, k_x1, k_x2 = jax.random.split(key, 3)
    params = init_params(k_params)

    # Small single-tile case.
    B = 8
    x = jax.random.normal(k_x1, (B, D_IN), jnp.float32)
    out = jax.block_until_ready(simplenet_forward(x, params))
    ref = _reference_forward(x, params)
    assert out.shape == (B, D_OUT), out.shape
    # approx=True reciprocal is EUP-approximate -> slightly looser tolerance.
    assert jnp.allclose(out, ref, atol=2e-3, rtol=2e-3), "mismatch vs reference (B=8)"

    # Multi-step grid + ragged-batch padding path.
    B2 = 200
    x2 = jax.random.normal(k_x2, (B2, D_IN), jnp.float32)
    out2 = jax.block_until_ready(simplenet_forward(x2, params, batch_tile=64))
    ref2 = _reference_forward(x2, params)
    assert out2.shape == (B2, D_OUT), out2.shape
    assert jnp.allclose(out2, ref2, atol=2e-3, rtol=2e-3), "mismatch vs reference (B=200)"

    print("KERNEL_OK")
</pallas_src>

<mosaic_0001>
module attributes {stable_mosaic.version = 11 : i64} {
  func.func @_simplenet_kernel(%arg0: i32, %arg1: memref<8x10xf32, #tpu.memory_space<vmem>>, %arg2: memref<10x50xf32, #tpu.memory_space<vmem>>, %arg3: memref<1x50xf32, #tpu.memory_space<vmem>>, %arg4: memref<50x100xf32, #tpu.memory_space<vmem>>, %arg5: memref<1x100xf32, #tpu.memory_space<vmem>>, %arg6: memref<100x100xf32, #tpu.memory_space<vmem>>, %arg7: memref<1x100xf32, #tpu.memory_space<vmem>>, %arg8: memref<8x100xf32, #tpu.memory_space<vmem>>) attributes {dimension_semantics = [#tpu.dimension_semantics<parallel>], iteration_bounds = array<i64: 1>, scalar_prefetch = 0 : i64, scratch_operands = 0 : i64, tpu.core_type = #tpu.core_type<tc>, window_params = [{transform_indices = @transform_0, window_bounds = array<i64: 8, 10>}, {pipeline_mode = #tpu.pipeline_mode<synchronous>, transform_indices = @transform_1, window_bounds = array<i64: 10, 50>}, {pipeline_mode = #tpu.pipeline_mode<synchronous>, transform_indices = @transform_2, window_bounds = array<i64: 1, 50>}, {pipeline_mode = #tpu.pipeline_mode<synchronous>, transform_indices = @transform_3, window_bounds = array<i64: 50, 100>}, {pipeline_mode = #tpu.pipeline_mode<synchronous>, transform_indices = @transform_4, window_bounds = array<i64: 1, 100>}, {pipeline_mode = #tpu.pipeline_mode<synchronous>, transform_indices = @transform_5, window_bounds = array<i64: 100, 100>}, {pipeline_mode = #tpu.pipeline_mode<synchronous>, transform_indices = @transform_6, window_bounds = array<i64: 1, 100>}, {transform_indices = @transform_7, window_bounds = array<i64: 8, 100>}]} {
    %c0 = arith.constant 0 : index
    %c0_0 = arith.constant 0 : index
    %0 = vector.load %arg1[%c0, %c0_0] : memref<8x10xf32, #tpu.memory_space<vmem>>, vector<8x10xf32>
    %c0_1 = arith.constant 0 : index
    %c0_2 = arith.constant 0 : index
    %1 = vector.load %arg2[%c0_1, %c0_2] : memref<10x50xf32, #tpu.memory_space<vmem>>, vector<10x50xf32>
    %cst = arith.constant dense<0.000000e+00> : vector<8x50xf32>
    %2 = tpu.matmul %0, %1, %cst {dimension_numbers = #tpu.dot_dimension_numbers<[1], [0], [0], [1], [0, 0, 1, 1], [], []>} : vector<8x10xf32>, vector<10x50xf32>, vector<8x50xf32> -> vector<8x50xf32>
    %c0_3 = arith.constant 0 : index
    %c0_4 = arith.constant 0 : index
    %3 = vector.load %arg3[%c0_3, %c0_4] : memref<1x50xf32, #tpu.memory_space<vmem>>, vector<1x50xf32>
    %4 = vector.broadcast %3 : vector<1x50xf32> to vector<8x50xf32>
    %5 = arith.addf %2, %4 : vector<8x50xf32>
    %cst_5 = arith.constant 0.000000e+00 : f32
    %6 = vector.broadcast %cst_5 : f32 to vector<8x50xf32>
    %7 = arith.maximumf %5, %6 : vector<8x50xf32>
    %c0_6 = arith.constant 0 : index
    %c0_7 = arith.constant 0 : index
    %8 = vector.load %arg4[%c0_6, %c0_7] : memref<50x100xf32, #tpu.memory_space<vmem>>, vector<50x100xf32>
    %cst_8 = arith.constant dense<0.000000e+00> : vector<8x100xf32>
    %9 = tpu.matmul %7, %8, %cst_8 {dimension_numbers = #tpu.dot_dimension_numbers<[1], [0], [0], [1], [0, 0, 1, 1], [], []>} : vector<8x50xf32>, vector<50x100xf32>, vector<8x100xf32> -> vector<8x100xf32>
    %c0_9 = arith.constant 0 : index
    %c0_10 = arith.constant 0 : index
    %10 = vector.load %arg5[%c0_9, %c0_10] : memref<1x100xf32, #tpu.memory_space<vmem>>, vector<1x100xf32>
    %11 = vector.broadcast %10 : vector<1x100xf32> to vector<8x100xf32>
    %12 = arith.addf %9, %11 : vector<8x100xf32>
    %cst_11 = arith.constant 0.000000e+00 : f32
    %13 = vector.broadcast %cst_11 : f32 to vector<8x100xf32>
    %14 = arith.maximumf %12, %13 : vector<8x100xf32>
    %c0_12 = arith.constant 0 : index
    %c0_13 = arith.constant 0 : index
    %15 = vector.load %arg6[%c0_12, %c0_13] : memref<100x100xf32, #tpu.memory_space<vmem>>, vector<100x100xf32>
    %cst_14 = arith.constant dense<0.000000e+00> : vector<8x100xf32>
    %16 = tpu.matmul %14, %15, %cst_14 {dimension_numbers = #tpu.dot_dimension_numbers<[1], [0], [0], [1], [0, 0, 1, 1], [], []>} : vector<8x100xf32>, vector<100x100xf32>, vector<8x100xf32> -> vector<8x100xf32>
    %c0_15 = arith.constant 0 : index
    %c0_16 = arith.constant 0 : index
    %17 = vector.load %arg7[%c0_15, %c0_16] : memref<1x100xf32, #tpu.memory_space<vmem>>, vector<1x100xf32>
    %18 = vector.broadcast %17 : vector<1x100xf32> to vector<8x100xf32>
    %19 = arith.addf %16, %18 : vector<8x100xf32>
    %cst_17 = arith.constant 0.000000e+00 : f32
    %20 = vector.broadcast %cst_17 : f32 to vector<8x100xf32>
    %21 = arith.subf %20, %19 : vector<8x100xf32>
    %22 = math.exp %21 : vector<8x100xf32>
    %cst_18 = arith.constant 1.000000e+00 : f32
    %23 = vector.broadcast %cst_18 : f32 to vector<8x100xf32>
    %24 = arith.addf %23, %22 : vector<8x100xf32>
    %25 = tpu.reciprocal %24 {approx = true} : vector<8x100xf32> -> vector<8x100xf32>
    %c0_19 = arith.constant 0 : index
    %c0_20 = arith.constant 0 : index
    %26 = vector.load %arg8[%c0_19, %c0_20] : memref<8x100xf32, #tpu.memory_space<vmem>>, vector<8x100xf32>
    tpu.vector_store %arg8[%c0_19, %c0_20], %25 {strides = array<i32>} : memref<8x100xf32, #tpu.memory_space<vmem>>, vector<8x100xf32>,
    return
  }
  func.func @transform_0(%arg0: i32) -> (i32, i32) {
    %c0_i32 = arith.constant 0 : i32
    %c0_i32_0 = arith.constant 0 : i32
    return %arg0, %c0_i32 : i32, i32
  }
  func.func @transform_1(%arg0: i32) -> (i32, i32) {
    %c0_i32 = arith.constant 0 : i32
    %c0_i32_0 = arith.constant 0 : i32
    %c0_i32_1 = arith.constant 0 : i32
    return %c0_i32, %c0_i32_0 : i32, i32
  }
  func.func @transform_2(%arg0: i32) -> (i32, i32) {
    %c0_i32 = arith.constant 0 : i32
    %c0_i32_0 = arith.constant 0 : i32
    %c0_i32_1 = arith.constant 0 : i32
    return %c0_i32, %c0_i32_0 : i32, i32
  }
  func.func @transform_3(%arg0: i32) -> (i32, i32) {
    %c0_i32 = arith.constant 0 : i32
    %c0_i32_0 = arith.constant 0 : i32
    %c0_i32_1 = arith.constant 0 : i32
    return %c0_i32, %c0_i32_0 : i32, i32
  }
  func.func @transform_4(%arg0: i32) -> (i32, i32) {
    %c0_i32 = arith.constant 0 : i32
    %c0_i32_0 = arith.constant 0 : i32
    %c0_i32_1 = arith.constant 0 : i32
    return %c0_i32, %c0_i32_0 : i32, i32
  }
  func.func @transform_5(%arg0: i32) -> (i32, i32) {
    %c0_i32 = arith.constant 0 : i32
    %c0_i32_0 = arith.constant 0 : i32
    %c0_i32_1 = arith.constant 0 : i32
    return %c0_i32, %c0_i32_0 : i32, i32
  }
  func.func @transform_6(%arg0: i32) -> (i32, i32) {
    %c0_i32 = arith.constant 0 : i32
    %c0_i32_0 = arith.constant 0 : i32
    %c0_i32_1 = arith.constant 0 : i32
    return %c0_i32, %c0_i32_0 : i32, i32
  }
  func.func @transform_7(%arg0: i32) -> (i32, i32) {
    %c0_i32 = arith.constant 0 : i32
    %c0_i32_0 = arith.constant 0 : i32
    return %arg0, %c0_i32 : i32, i32
  }
}

</mosaic_0001>

<llo_original>
// kernel: simplenet_forward.1
$region0: #{simplenet_forward.1}
  #allocation0 [shape = 'u32[]', space=smem, size = 0x4, offset = 0x4, fixed_abs, tag = 'smem constant byte address 0x4 - core index']
  #allocation1 [shape = 'u32[144,128]{1,0:T(1,128)}', space=vmem, size = 0x12000, scoped, tag = 'internal scratch']
  %s0 = inlined_call_operand.hbm [shape: f32[8,10], index: 0, kind: input, shape index: {}]
  %s1 = inlined_call_operand.hbm [shape: f32[10,50], index: 1, kind: input, shape index: {}]
  %s2 = inlined_call_operand.vmem [shape: f32[1,50], index: 2, kind: input, shape index: {}]
  %s3 = inlined_call_operand.hbm [shape: f32[50,100], index: 3, kind: input, shape index: {}]
  %s4 = inlined_call_operand.vmem [shape: f32[1,100], index: 4, kind: input, shape index: {}]
  %s5 = inlined_call_operand.hbm [shape: f32[100,100], index: 5, kind: input, shape index: {}]
  %s6 = inlined_call_operand.vmem [shape: f32[1,100], index: 6, kind: input, shape index: {}]
  %s7 = inlined_call_operand.hbm [shape: f32[8,100], index: 7, kind: output, shape index: {}]
  %s8 = sld [smem:[#allocation0]]
  $region54: #{simplenet_forward.1} parent=0
    _
  %s10 = ssub.s32 1, %s8
  %s11 = scalar_select 0, %s10, %s8
  $region1: #{simplenet_forward.1} parent=0
    #allocation2 [shape = 'u8[4096]{0}', space=vmem, size = 0x1000, scoped, tag = 'input window, operand 0, single buffered']
    #allocation3 [shape = 's32[1]{0}', space=sflag, size = 0x4, scoped, tag = 'scoped memory for simplenet_forward.1']
    #allocation4 [shape = 's32[1]{0}', space=sflag, size = 0x4, scoped, tag = 'scoped memory for simplenet_forward.1']
    #allocation5 [shape = 'u8[8192]{0}', space=vmem, size = 0x2000, scoped, tag = 'input window, operand 1, single buffered']
    #allocation6 [shape = 's32[1]{0}', space=sflag, size = 0x4, scoped, tag = 'scoped memory for simplenet_forward.1']
    #allocation7 [shape = 'u8[28672]{0}', space=vmem, size = 0x7000, scoped, tag = 'input window, operand 3, single buffered']
    #allocation8 [shape = 'u8[53248]{0}', space=vmem, size = 0xd000, scoped, tag = 'input window, operand 5, single buffered']
    #allocation9 [shape = 's32[1]{0}', space=sflag, size = 0x4, scoped, tag = 'scoped memory for simplenet_forward.1']
    #allocation10 [shape = 'u8[4096]{0}', space=vmem, size = 0x1000, scoped, tag = 'output window, operand 0, single buffered']
    %12 = vsyncpa [#allocation3], 0
    %13 = vsyncpa [#allocation6], 0
    %14 = vsyncpa [#allocation9], 0
    %15 = vsyncpa [#allocation4], 0
    // Predicated region
    $region2: #{simplenet_forward.1} parent=1 // pred_check
      _
    $region3: #{simplenet_forward.1} parent=1 // pred_check_branch
      %17 = sbr.rel (0) target = $region5
    $region4: #{simplenet_forward.1} parent=1 // pred_region
      %s19 = ssub.s32 128, 128
      %20 = vsyncadd [#allocation3], %s19
      %s22 = sshll.u32 [#allocation2], 4
      %s23 = int_to_ptr.vmem [resolvable:$true] %s22
      %25 = dma.hbm_to_vmem [thread:$0]  %s0, 128, %s23, [#allocation3]
    $region5: #{simplenet_forward.1} parent=1 // pred_fallthru
      _
    // Predicated region
    $region6: #{simplenet_forward.1} parent=1 // pred_check
      _
    $region7: #{simplenet_forward.1} parent=1 // pred_check_branch
      %27 = sbr.rel (0) target = $region9
    $region8: #{simplenet_forward.1} parent=1 // pred_region
      %s29 = ssub.s32 256, 256
      %30 = vsyncadd [#allocation6], %s29
      %s31 = sshll.u32 [#allocation5], 4
      %s32 = int_to_ptr.vmem [resolvable:$true] %s31
      %37 = dma.hbm_to_vmem [thread:$0]  %s1, 256, %s32, [#allocation6], 128, 128, 8
    $region9: #{simplenet_forward.1} parent=1 // pred_fallthru
      _
    // Predicated region
    $region10: #{simplenet_forward.1} parent=1 // pred_check
      _
    $region11: #{simplenet_forward.1} parent=1 // pred_check_branch
      %39 = sbr.rel (0) target = $region13
    $region12: #{simplenet_forward.1} parent=1 // pred_region
      _
    $region13: #{simplenet_forward.1} parent=1 // pred_fallthru
      _
    // Predicated region
    $region14: #{simplenet_forward.1} parent=1 // pred_check
      _
    $region15: #{simplenet_forward.1} parent=1 // pred_check_branch
      %41 = sbr.rel (0) target = $region17
    $region16: #{simplenet_forward.1} parent=1 // pred_region
      %s43 = ssub.s32 896, 896
      %44 = vsyncadd [#allocation6], %s43
      %s45 = sshll.u32 [#allocation7], 4
      %s46 = int_to_ptr.vmem [resolvable:$true] %s45
      %51 = dma.hbm_to_vmem [thread:$0]  %s3, 896, %s46, [#allocation6], 128, 128, 8
    $region17: #{simplenet_forward.1} parent=1 // pred_fallthru
      _
    // Predicated region
    $region18: #{simplenet_forward.1} parent=1 // pred_check
      _
    $region19: #{simplenet_forward.1} parent=1 // pred_check_branch
      %53 = sbr.rel (0) target = $region21
    $region20: #{simplenet_forward.1} parent=1 // pred_region
      _
    $region21: #{simplenet_forward.1} parent=1 // pred_fallthru
      _
    // Predicated region
    $region22: #{simplenet_forward.1} parent=1 // pred_check
      _
    $region23: #{simplenet_forward.1} parent=1 // pred_check_branch
      %55 = sbr.rel (0) target = $region25
    $region24: #{simplenet_forward.1} parent=1 // pred_region
      %s57 = ssub.s32 1664, 1664
      %58 = vsyncadd [#allocation9], %s57
      %s59 = sshll.u32 [#allocation8], 4
      %s60 = int_to_ptr.vmem [resolvable:$true] %s59
      %65 = dma.hbm_to_vmem [thread:$0]  %s5, 1664, %s60, [#allocation9], 128, 128, 8
    $region25: #{simplenet_forward.1} parent=1 // pred_fallthru
      _
    // Predicated region
    $region26: #{simplenet_forward.1} parent=1 // pred_check
      _
    $region27: #{simplenet_forward.1} parent=1 // pred_check_branch
      %67 = sbr.rel (0) target = $region29
    $region28: #{simplenet_forward.1} parent=1 // pred_region
      _
    $region29: #{simplenet_forward.1} parent=1 // pred_fallthru
      _
    // Predicated region
    $region30: #{simplenet_forward.1} parent=1 // pred_check
      _
    $region31: #{simplenet_forward.1} parent=1 // pred_check_branch
      %69 = sbr.rel (0) target = $region33
    $region32: #{simplenet_forward.1} parent=1 // pred_region
      %70 = dma.done [#allocation3], 128
    $region33: #{simplenet_forward.1} parent=1 // pred_fallthru
      _
    // Predicated region
    $region34: #{simplenet_forward.1} parent=1 // pred_check
      _
    $region35: #{simplenet_forward.1} parent=1 // pred_check_branch
      %72 = sbr.rel (0) target = $region37
    $region36: #{simplenet_forward.1} parent=1 // pred_region
      %73 = dma.done [#allocation6], 256
    $region37: #{simplenet_forward.1} parent=1 // pred_fallthru
      _
    // Predicated region
    $region38: #{simplenet_forward.1} parent=1 // pred_check
      _
    $region39: #{simplenet_forward.1} parent=1 // pred_check_branch
      %75 = sbr.rel (0) target = $region41
    $region40: #{simplenet_forward.1} parent=1 // pred_region
      %76 = dma.done [#allocation6], 896
    $region41: #{simplenet_forward.1} parent=1 // pred_fallthru
      _
    // Predicated region
    $region42: #{simplenet_forward.1} parent=1 // pred_check
      _
    $region43: #{simplenet_forward.1} parent=1 // pred_check_branch
      %78 = sbr.rel (0) target = $region45
    $region44: #{simplenet_forward.1} parent=1 // pred_region
      %79 = dma.done [#allocation9], 1664
    $region45: #{simplenet_forward.1} parent=1 // pred_fallthru
      _
    %v80 = vld [vmem:[#allocation2] sm:$0xff]
    %v81 = vld [vmem:[#allocation5] sm:$0xff]
    %v82 = vld [vmem:[#allocation5 + $0x8] sm:$0x3]
    %v83 = vld [vmem:[%s2] sm:$0x1]
    %v85 = vlaneseq
    %v86 = vshrl.u32 %v85, 7
    %v87 = vsub.s32 0, %v86
    %v88 = vrot.slane %v83, %v87
    %vm90 = vcmask 80896
    %v92 = vsel %vm90, %v80, 0
    %vm94 = vcmask 1041408
    %v96 = vsel %vm94, %v82, 0
    %98 = vmatprep.subr.mxu0 0.0
    %99 = vmatpush1.msra.mxu0 %v81
    %100 = vmatprep.subr.mxu0 0.0
    %101 = vmatpush1.msra.mxu0 %v96
    %102 = vmatprep.subr.mxu0 0.0
    %103 = vmatpush1.msra.mxu0 0.0
    %104 = vmatprep.subr.mxu0 0.0
    %105 = vmatpush1.msra.mxu0 0.0
    %106 = vmatprep.subr.mxu0 0.0
    %107 = vmatpush1.msra.mxu0 0.0
    %108 = vmatprep.subr.mxu0 0.0
    %109 = vmatpush1.msra.mxu0 0.0
    %110 = vmatprep.subr.mxu0 0.0
    %111 = vmatpush1.msra.mxu0 0.0
    %112 = vmatprep.subr.mxu0 0.0
    %113 = vmatpush1.msra.mxu0 0.0
    %114 = vmatprep.subr.mxu0 0.0
    %115 = vmatpush1.msra.mxu0 0.0
    %116 = vmatprep.subr.mxu0 0.0
    %117 = vmatpush1.msra.mxu0 0.0
    %118 = vmatprep.subr.mxu0 0.0
    %119 = vmatpush1.msra.mxu0 0.0
    %120 = vmatprep.subr.mxu0 0.0
    %121 = vmatpush1.msra.mxu0 0.0
    %122 = vmatprep.subr.mxu0 0.0
    %123 = vmatpush1.msra.mxu0 0.0
    %124 = vmatprep.subr.mxu0 0.0
    %125 = vmatpush1.msra.mxu0 0.0
    %126 = vmatprep.subr.mxu0 0.0
    %127 = vmatpush1.msra.mxu0 0.0
    %128 = vmatprep.subr.mxu0 0.0
    %129 = vmatpush1.msra.mxu0 0.0
    %130 = vmatprep.subr.mxu0 0.0
    %131 = vmatpush1.msra.mxu0 0.0
    %132 = vmatprep.subr.mxu0 0.0
    %133 = vmatpush1.msra.mxu0 0.0
    %134 = vmatprep.subr.mxu0 0.0
    %135 = vmatpush1.msra.mxu0 0.0
    %136 = vmatprep.subr.mxu0 0.0
    %137 = vmatpush1.msra.mxu0 0.0
    %138 = vmatprep.subr.mxu0 0.0
    %139 = vmatpush1.msra.mxu0 0.0
    %140 = vmatprep.subr.mxu0 0.0
    %141 = vmatpush1.msra.mxu0 0.0
    %142 = vmatprep.subr.mxu0 0.0
    %143 = vmatpush1.msra.mxu0 0.0
    %144 = vmatprep.subr.mxu0 0.0
    %145 = vmatpush1.msra.mxu0 0.0
    %146 = vmatprep.subr.mxu0 0.0
    %147 = vmatpush1.msra.mxu0 0.0
    %148 = vmatprep.subr.mxu0 0.0
    %149 = vmatpush1.msra.mxu0 0.0
    %150 = vmatprep.subr.mxu0 0.0
    %151 = vmatpush1.msra.mxu0 0.0
    %152 = vmatprep.subr.mxu0 0.0
    %153 = vmatpush1.msra.mxu0 0.0
    %154 = vmatprep.subr.mxu0 0.0
    %155 = vmatpush1.msra.mxu0 0.0
    %156 = vmatprep.subr.mxu0 0.0
    %157 = vmatpush1.msra.mxu0 0.0
    %158 = vmatprep.subr.mxu0 0.0
    %159 = vmatpush1.msra.mxu0 0.0
    %160 = vmatprep.subr.mxu0 0.0
    %161 = vmatpush1.msra.mxu0 0.0
    %162 = vmatprep.mubr.f32.mxu0 0.0
    %163 = vmatmul.mubr.f32.gmra.mrb[0].mxu0 %v92
    %v164 = vpop.f32.mrb[0].mxu0
    %v165 = vadd.f32 %v88, %v164
    %v166 = vpop.f32.mrb[0].mxu0
    %167 = vdwg.mxu0
    %v168 = vmax.f32 %v165, 0.0
    %v169 = vld [vmem:[#allocation7] sm:$0xff]
    %v170 = vld [vmem:[#allocation7 + $0x8] sm:$0xff]
    %v171 = vld [vmem:[#allocation7 + $0x10] sm:$0xff]
    %v172 = vld [vmem:[#allocation7 + $0x18] sm:$0xff]
    %v173 = vld [vmem:[#allocation7 + $0x20] sm:$0xff]
    %v174 = vld [vmem:[#allocation7 + $0x28] sm:$0xff]
    %v175 = vld [vmem:[#allocation7 + $0x30] sm:$0x3]
    %v176 = vld [vmem:[%s4] sm:$0x1]
    %v178 = vlaneseq
    %v179 = vshrl.u32 %v178, 7
    %v180 = vsub.s32 0, %v179
    %v181 = vrot.slane %v176, %v180
    %vm183 = vcmask 408576
    %v185 = vsel %vm183, %v168, 0
    %v188 = vsel %vm94, %v175, 0
    %190 = vmatprep.subr.mxu0 0.0
    %191 = vmatpush1.msra.mxu0 %v169
    %192 = vmatprep.subr.mxu0 0.0
    %193 = vmatpush1.msra.mxu0 %v170
    %194 = vmatprep.subr.mxu0 0.0
    %195 = vmatpush1.msra.mxu0 %v171
    %196 = vmatprep.subr.mxu0 0.0
    %197 = vmatpush1.msra.mxu0 %v172
    %198 = vmatprep.subr.mxu0 0.0
    %199 = vmatpush1.msra.mxu0 %v173
    %200 = vmatprep.subr.mxu0 0.0
    %201 = vmatpush1.msra.mxu0 %v174
    %202 = vmatprep.subr.mxu0 0.0
    %203 = vmatpush1.msra.mxu0 %v188
    %204 = vmatprep.subr.mxu0 0.0
    %205 = vmatpush1.msra.mxu0 0.0
    %206 = vmatprep.subr.mxu0 0.0
    %207 = vmatpush1.msra.mxu0 0.0
    %208 = vmatprep.subr.mxu0 0.0
    %209 = vmatpush1.msra.mxu0 0.0
    %210 = vmatprep.subr.mxu0 0.0
    %211 = vmatpush1.msra.mxu0 0.0
    %212 = vmatprep.subr.mxu0 0.0
    %213 = vmatpush1.msra.mxu0 0.0
    %214 = vmatprep.subr.mxu0 0.0
    %215 = vmatpush1.msra.mxu0 0.0
    %216 = vmatprep.subr.mxu0 0.0
    %217 = vmatpush1.msra.mxu0 0.0
    %218 = vmatprep.subr.mxu0 0.0
    %219 = vmatpush1.msra.mxu0 0.0
    %220 = vmatprep.subr.mxu0 0.0
    %221 = vmatpush1.msra.mxu0 0.0
    %222 = vmatprep.subr.mxu0 0.0
    %223 = vmatpush1.msra.mxu0 0.0
    %224 = vmatprep.subr.mxu0 0.0
    %225 = vmatpush1.msra.mxu0 0.0
    %226 = vmatprep.subr.mxu0 0.0
    %227 = vmatpush1.msra.mxu0 0.0
    %228 = vmatprep.subr.mxu0 0.0
    %229 = vmatpush1.msra.mxu0 0.0
    %230 = vmatprep.subr.mxu0 0.0
    %231 = vmatpush1.msra.mxu0 0.0
    %232 = vmatprep.subr.mxu0 0.0
    %233 = vmatpush1.msra.mxu0 0.0
    %234 = vmatprep.subr.mxu0 0.0
    %235 = vmatpush1.msra.mxu0 0.0
    %236 = vmatprep.subr.mxu0 0.0
    %237 = vmatpush1.msra.mxu0 0.0
    %238 = vmatprep.subr.mxu0 0.0
    %239 = vmatpush1.msra.mxu0 0.0
    %240 = vmatprep.subr.mxu0 0.0
    %241 = vmatpush1.msra.mxu0 0.0
    %242 = vmatprep.subr.mxu0 0.0
    %243 = vmatpush1.msra.mxu0 0.0
    %244 = vmatprep.subr.mxu0 0.0
    %245 = vmatpush1.msra.mxu0 0.0
    %246 = vmatprep.subr.mxu0 0.0
    %247 = vmatpush1.msra.mxu0 0.0
    %248 = vmatprep.subr.mxu0 0.0
    %249 = vmatpush1.msra.mxu0 0.0
    %250 = vmatprep.subr.mxu0 0.0
    %251 = vmatpush1.msra.mxu0 0.0
    %252 = vmatprep.subr.mxu0 0.0
    %253 = vmatpush1.msra.mxu0 0.0
    %254 = vmatprep.mubr.f32.mxu0 0.0
    %255 = vmatmul.mubr.f32.gmra.mrb[0].mxu0 %v185
    %v256 = vpop.f32.mrb[0].mxu0
    %v257 = vadd.f32 %v181, %v256
    %v258 = vpop.f32.mrb[0].mxu0
    %259 = vdwg.mxu0
    %v260 = vmax.f32 %v257, 0.0
    %v261 = vld [vmem:[#allocation8] sm:$0xff]
    %v262 = vld [vmem:[#allocation8 + $0x8] sm:$0xff]
    %v263 = vld [vmem:[#allocation8 + $0x10] sm:$0xff]
    %v264 = vld [vmem:[#allocation8 + $0x18] sm:$0xff]
    %v265 = vld [vmem:[#allocation8 + $0x20] sm:$0xff]
    %v266 = vld [vmem:[#allocation8 + $0x28] sm:$0xff]
    %v267 = vld [vmem:[#allocation8 + $0x30] sm:$0xff]
    %v268 = vld [vmem:[#allocation8 + $0x38] sm:$0xff]
    %v269 = vld [vmem:[#allocation8 + $0x40] sm:$0xff]
    %v270 = vld [vmem:[#allocation8 + $0x48] sm:$0xff]
    %v271 = vld [vmem:[#allocation8 + $0x50] sm:$0xff]
    %v272 = vld [vmem:[#allocation8 + $0x58] sm:$0xff]
    %v273 = vld [vmem:[#allocation8 + $0x60] sm:$0xf]
    %v274 = vld [vmem:[%s6] sm:$0x1]
    %v276 = vlaneseq
    %v277 = vshrl.u32 %v276, 7
    %v278 = vsub.s32 0, %v277
    %v279 = vrot.slane %v274, %v278
    %vm281 = vcmask 818176
    %v283 = vsel %vm281, %v260, 0
    %vm285 = vcmask 1043456
    %v287 = vsel %vm285, %v273, 0
    %289 = vmatprep.subr.mxu0 0.0
    %290 = vmatpush1.msra.mxu0 %v261
    %291 = vmatprep.subr.mxu0 0.0
    %292 = vmatpush1.msra.mxu0 %v262
    %293 = vmatprep.subr.mxu0 0.0
    %294 = vmatpush1.msra.mxu0 %v263
    %295 = vmatprep.subr.mxu0 0.0
    %296 = vmatpush1.msra.mxu0 %v264
    %297 = vmatprep.subr.mxu0 0.0
    %298 = vmatpush1.msra.mxu0 %v265
    %299 = vmatprep.subr.mxu0 0.0
    %300 = vmatpush1.msra.mxu0 %v266
    %301 = vmatprep.subr.mxu0 0.0
    %302 = vmatpush1.msra.mxu0 %v267
    %303 = vmatprep.subr.mxu0 0.0
    %304 = vmatpush1.msra.mxu0 %v268
    %305 = vmatprep.subr.mxu0 0.0
    %306 = vmatpush1.msra.mxu0 %v269
    %307 = vmatprep.subr.mxu0 0.0
    %308 = vmatpush1.msra.mxu0 %v270
    %309 = vmatprep.subr.mxu0 0.0
    %310 = vmatpush1.msra.mxu0 %v271
    %311 = vmatprep.subr.mxu0 0.0
    %312 = vmatpush1.msra.mxu0 %v272
    %313 = vmatprep.subr.mxu0 0.0
    %314 = vmatpush1.msra.mxu0 %v287
    %315 = vmatprep.subr.mxu0 0.0
    %316 = vmatpush1.msra.mxu0 0.0
    %317 = vmatprep.subr.mxu0 0.0
    %318 = vmatpush1.msra.mxu0 0.0
    %319 = vmatprep.subr.mxu0 0.0
    %320 = vmatpush1.msra.mxu0 0.0
    %321 = vmatprep.subr.mxu0 0.0
    %322 = vmatpush1.msra.mxu0 0.0
    %323 = vmatprep.subr.mxu0 0.0
    %324 = vmatpush1.msra.mxu0 0.0
    %325 = vmatprep.subr.mxu0 0.0
    %326 = vmatpush1.msra.mxu0 0.0
    %327 = vmatprep.subr.mxu0 0.0
    %328 = vmatpush1.msra.mxu0 0.0
    %329 = vmatprep.subr.mxu0 0.0
    %330 = vmatpush1.msra.mxu0 0.0
    %331 = vmatprep.subr.mxu0 0.0
    %332 = vmatpush1.msra.mxu0 0.0
    %333 = vmatprep.subr.mxu0 0.0
    %334 = vmatpush1.msra.mxu0 0.0
    %335 = vmatprep.subr.mxu0 0.0
    %336 = vmatpush1.msra.mxu0 0.0
    %337 = vmatprep.subr.mxu0 0.0
    %338 = vmatpush1.msra.mxu0 0.0
    %339 = vmatprep.subr.mxu0 0.0
    %340 = vmatpush1.msra.mxu0 0.0
    %341 = vmatprep.subr.mxu0 0.0
    %342 = vmatpush1.msra.mxu0 0.0
    %343 = vmatprep.subr.mxu0 0.0
    %344 = vmatpush1.msra.mxu0 0.0
    %345 = vmatprep.subr.mxu0 0.0
    %346 = vmatpush1.msra.mxu0 0.0
    %347 = vmatprep.subr.mxu0 0.0
    %348 = vmatpush1.msra.mxu0 0.0
    %349 = vmatprep.subr.mxu0 0.0
    %350 = vmatpush1.msra.mxu0 0.0
    %351 = vmatprep.subr.mxu0 0.0
    %352 = vmatpush1.msra.mxu0 0.0
    %353 = vmatprep.mubr.f32.mxu0 0.0
    %354 = vmatmul.mubr.f32.gmra.mrb[0].mxu0 %v283
    %v355 = vpop.f32.mrb[0].mxu0
    %v356 = vadd.f32 %v279, %v355
    %v357 = vpop.f32.mrb[0].mxu0
    %358 = vdwg.mxu0
    %v359 = vsub.f32 0.0, %v356
    %v360 = vmul.f32 %v359, 1.442695
    %v361 = vpow.pop %v360
    %v362 = vadd.f32 %v361, 1.0
    %v363 = vrcp.pop %v362
    %364 = vst.msk [vmem:[#allocation10] sm:$0xff] %vm281, %v363
    // Predicated region
    $region46: #{simplenet_forward.1} parent=1 // pred_check
      _
    $region47: #{simplenet_forward.1} parent=1 // pred_check_branch
      %366 = sbr.rel (0) target = $region49
    $region48: #{simplenet_forward.1} parent=1 // pred_region
      %s368 = ssub.s32 128, 128
      %369 = vsyncadd [#allocation4], %s368
      %s371 = sshll.u32 [#allocation10], 4
      %s372 = int_to_ptr.vmem [resolvable:$true] %s371
      %374 = dma.vmem_to_hbm [thread:$0]  %s372, 128, %s7, [#allocation4]
    $region49: #{simplenet_forward.1} parent=1 // pred_fallthru
      _
    // Predicated region
    $region50: #{simplenet_forward.1} parent=1 // pred_check
      _
    $region51: #{simplenet_forward.1} parent=1 // pred_check_branch
      %376 = sbr.rel (0) target = $region53
    $region52: #{simplenet_forward.1} parent=1 // pred_region
      %377 = dma.done [#allocation4], 128
    $region53: #{simplenet_forward.1} parent=1 // pred_fallthru
      _
    %378 = vsyncpa [#allocation3], 1
    %379 = vsyncpa [#allocation6], 1
    %380 = vsyncpa [#allocation9], 1
    %381 = vsyncpa [#allocation4], 1

</llo_original>
